<compile_context>
chip_gen: v5e
topology: v5e:2x2
jax: 0.10.0
libtpu: 0.0.40
codegen_flags: <defaults>
</compile_context>

<pallas_src>
import functools

import jax
import jax.numpy as jnp
from jax.experimental import pallas as pl
from jax.experimental.pallas import tpu as pltpu

_INV_SQRT2 = 0.7071067811865476  # 1/sqrt(2), f32


def _round_up(n, m):
    return ((n + m - 1) // m) * m


def _vmem_capacity_bytes():
    # Generation-aware VMEM cap; conservative fallback (v7x per-TC = 64 MiB).
    try:
        return int(pltpu.get_tpu_info().vmem_capacity_bytes)
    except Exception:
        return 64 * 1024 * 1024


def _mlp_kernel(x_ref, w1_ref, b1_ref, w2_ref, b2_ref, o_ref):
    n_tasks = o_ref.shape[-1]

    # Cast x to bf16 in-kernel (VPU work hidden under the streaming DMA).
    x = x_ref[...].astype(jnp.bfloat16)

    # First linear: (TB, D_in) @ (D_in, H_pad), f32 accumulation on the MXU.
    h = jnp.dot(x, w1_ref[...], preferred_element_type=jnp.float32)
    h = h + b1_ref[...]  # (1, H_pad) broadcasts over the batch tile

    # Exact GELU (matches torch.nn.GELU() default, erf-based).
    h = 0.5 * h * (1.0 + jax.lax.erf(h * _INV_SQRT2))

    # Second linear: (TB, H_pad) @ (H_pad, N_pad), bf16 inputs, f32 acc.
    y = jnp.dot(h.astype(jnp.bfloat16), w2_ref[...],
                preferred_element_type=jnp.float32)
    y = y + b2_ref[...]

    # Store only the true task columns (padded cols would just be sigmoid(0)).
    o_ref[...] = jax.nn.sigmoid(y[:, :n_tasks]).astype(o_ref.dtype)


def prepare_params(w1, b1, w2, b2):
    """Pad (to lane-dense 128 multiples) and cast weights ONCE, outside the
    per-call path.  w1: (in, hidden); b1: (hidden,); w2: (hidden, n_tasks)."""
    d_in, hidden = w1.shape
    n_tasks = w2.shape[1]
    h_pad = _round_up(hidden, 128)
    n_pad = _round_up(n_tasks, 128)

    # Zero-padding is mathematically inert: padded hidden cols stay 0 through
    # GELU and hit zero rows of w2; padded task cols are never stored.
    w1_p = jnp.pad(w1, ((0, 0), (0, h_pad - hidden))).astype(jnp.bfloat16)
    b1_p = jnp.pad(b1, (0, h_pad - hidden)).reshape(1, h_pad).astype(jnp.float32)
    w2_p = jnp.pad(w2, ((0, h_pad - hidden), (0, n_pad - n_tasks))).astype(jnp.bfloat16)
    b2_p = jnp.pad(b2, (0, n_pad - n_tasks)).reshape(1, n_pad).astype(jnp.float32)
    return w1_p, b1_p, w2_p, b2_p


@functools.partial(jax.jit, static_argnames=("n_tasks", "block_batch"))
def multitask_regression_forward(x, w1_p, b1_p, w2_p, b2_p, *, n_tasks,
                                 block_batch=2048):
    """x: (B, input_size); padded params from prepare_params().
       Returns (out (B, n_tasks) f32, None)."""
    B, d_in = x.shape
    h_pad = w1_p.shape[1]
    n_pad = w2_p.shape[1]

    # --- batch tiling --------------------------------------------------------
    b8 = _round_up(max(B, 1), 8)
    # >= 2 grid steps whenever the batch allows, so the "parallel" batch axis
    # shards across both v7x TensorCores; tb <= block_batch.
    min_steps = 2 if b8 >= 16 else 1
    n_steps = max(min_steps, pl.cdiv(b8, block_batch))
    tb = _round_up(pl.cdiv(b8, n_steps), 8)
    n_steps = pl.cdiv(b8, tb)
    b_pad = tb * n_steps

    x_in = x if b_pad == B else jnp.pad(x, ((0, b_pad - B), (0, 0)))

    grid_spec = pl.GridSpec(
        grid=(n_steps,),
        in_specs=[
            pl.BlockSpec((tb, d_in), lambda i: (i, 0)),      # x: streams
            pl.BlockSpec((d_in, h_pad), lambda i: (0, 0)),   # w1: VMEM-resident
            pl.BlockSpec((1, h_pad), lambda i: (0, 0)),      # b1: VMEM-resident
            pl.BlockSpec((h_pad, n_pad), lambda i: (0, 0)),  # w2: VMEM-resident
            pl.BlockSpec((1, n_pad), lambda i: (0, 0)),      # b2: VMEM-resident
        ],
        # Last block dim equals full array dim (n_tasks) -> legal, and we only
        # ever write the real task columns.
        out_specs=pl.BlockSpec((tb, n_tasks), lambda i: (i, 0)),
    )

    # Rough VMEM footprint (double-buffered streams + resident weights + temps).
    x_bytes = x.dtype.itemsize
    footprint = (
        2 * tb * d_in * x_bytes                     # x tiles (2 buffers)
        + 2 * tb * n_tasks * 4                      # out tiles (2 buffers, f32)
        + d_in * h_pad * 2 + h_pad * n_pad * 2      # resident bf16 weights
        + (h_pad + n_pad) * 4                       # biases (f32)
        + tb * h_pad * (4 + 2) + tb * n_pad * 4     # h (f32 + bf16 cast) + y
    )
    vmem_limit = min(max(32 * 1024 * 1024, 2 * footprint),
                     int(0.85 * _vmem_capacity_bytes()))

    cost = pl.CostEstimate(
        flops=2 * b_pad * (d_in * h_pad + h_pad * n_pad),
        transcendentals=b_pad * (h_pad + n_pad),
        bytes_accessed=(b_pad * d_in * x_bytes + b_pad * n_tasks * 4
                        + d_in * h_pad * 2 + h_pad * n_pad * 2
                        + (h_pad + n_pad) * 4),
    )

    out_p = pl.pallas_call(
        _mlp_kernel,
        out_shape=jax.ShapeDtypeStruct((b_pad, n_tasks), jnp.float32),
        grid_spec=grid_spec,
        compiler_params=pltpu.CompilerParams(
            dimension_semantics=("parallel",),   # shards across TCs on v7x
            vmem_limit_bytes=int(vmem_limit),
        ),
        cost_estimate=cost,
    )(x_in, w1_p, b1_p, w2_p, b2_p)

    out = out_p if b_pad == B else out_p[:B]   # tiny (n_tasks cols) tail slice
    return out, None


def init_params(key, n_tasks, input_size, hidden_size, dtype=jnp.float32):
    """Deterministic init mimicking nn.Linear's uniform(-1/sqrt(fan_in), 1/sqrt(fan_in))."""
    k1, k2, k3, k4 = jax.random.split(key, 4)
    bound1 = 1.0 / jnp.sqrt(jnp.asarray(input_size, dtype))
    bound2 = 1.0 / jnp.sqrt(jnp.asarray(hidden_size, dtype))
    # Stored as (in, out) — transpose of PyTorch's (out, in) weight layout.
    w1 = jax.random.uniform(k1, (input_size, hidden_size), dtype, -bound1, bound1)
    b1 = jax.random.uniform(k2, (hidden_size,), dtype, -bound1, bound1)
    w2 = jax.random.uniform(k3, (hidden_size, n_tasks), dtype, -bound2, bound2)
    b2 = jax.random.uniform(k4, (n_tasks,), dtype, -bound2, bound2)
    return w1, b1, w2, b2


if __name__ == "__main__":
    n_tasks, input_size, hidden_size = 4, 32, 32
    batch = 64  # small, but exercises a 2-step grid (tb=32)

    key = jax.random.PRNGKey(0)
    kx, kp = jax.random.split(key)
    x = jax.random.normal(kx, (batch, input_size), jnp.float32)
    w1, b1, w2, b2 = init_params(kp, n_tasks, input_size, hidden_size)

    # One-time weight pad/cast (hoisted out of the per-call path).
    w1_p, b1_p, w2_p, b2_p = prepare_params(w1, b1, w2, b2)

    out, none_val = multitask_regression_forward(
        x, w1_p, b1_p, w2_p, b2_p, n_tasks=n_tasks)
    out = jax.block_until_ready(out)

    # Reference check in plain JAX (f32, exact-GELU — same semantics as nn.GELU()).
    h_ref = x @ w1 + b1
    h_ref = 0.5 * h_ref * (1.0 + jax.lax.erf(h_ref / jnp.sqrt(2.0)))
    ref = jax.nn.sigmoid(h_ref @ w2 + b2)

    assert out.shape == (batch, n_tasks)
    assert none_val is None
    # bf16 matmul inputs (f32 accumulation) -> loosened tolerance vs pure f32.
    assert jnp.allclose(out, ref, atol=2e-2, rtol=2e-2), \
        f"max abs err {jnp.max(jnp.abs(out - ref))}"

    print("KERNEL_OK")
</pallas_src>

<mosaic_0001>
module attributes {stable_mosaic.version = 11 : i64} {
  func.func @_mlp_kernel(%arg0: i32, %arg1: memref<32x32xf32, #tpu.memory_space<vmem>>, %arg2: memref<32x128xbf16, #tpu.memory_space<vmem>>, %arg3: memref<1x128xf32, #tpu.memory_space<vmem>>, %arg4: memref<128x128xbf16, #tpu.memory_space<vmem>>, %arg5: memref<1x128xf32, #tpu.memory_space<vmem>>, %arg6: memref<32x4xf32, #tpu.memory_space<vmem>>) attributes {dimension_semantics = [#tpu.dimension_semantics<parallel>], iteration_bounds = array<i64: 2>, scalar_prefetch = 0 : i64, scratch_operands = 0 : i64, tpu.core_type = #tpu.core_type<tc>, window_params = [{transform_indices = @transform_0, window_bounds = array<i64: 32, 32>}, {pipeline_mode = #tpu.pipeline_mode<synchronous>, transform_indices = @transform_1, window_bounds = array<i64: 32, 128>}, {pipeline_mode = #tpu.pipeline_mode<synchronous>, transform_indices = @transform_2, window_bounds = array<i64: 1, 128>}, {pipeline_mode = #tpu.pipeline_mode<synchronous>, transform_indices = @transform_3, window_bounds = array<i64: 128, 128>}, {pipeline_mode = #tpu.pipeline_mode<synchronous>, transform_indices = @transform_4, window_bounds = array<i64: 1, 128>}, {transform_indices = @transform_5, window_bounds = array<i64: 32, 4>}]} {
    %c0 = arith.constant 0 : index
    %c0_0 = arith.constant 0 : index
    %0 = vector.load %arg1[%c0, %c0_0] : memref<32x32xf32, #tpu.memory_space<vmem>>, vector<32x32xf32>
    %1 = arith.truncf %0 : vector<32x32xf32> to vector<32x32xbf16>
    %c0_1 = arith.constant 0 : index
    %c0_2 = arith.constant 0 : index
    %2 = vector.load %arg2[%c0_1, %c0_2] : memref<32x128xbf16, #tpu.memory_space<vmem>>, vector<32x128xbf16>
    %cst = arith.constant dense<0.000000e+00> : vector<32x128xf32>
    %3 = tpu.matmul %1, %2, %cst {dimension_numbers = #tpu.dot_dimension_numbers<[1], [0], [0], [1], [0, 0, 1, 1], [], []>} : vector<32x32xbf16>, vector<32x128xbf16>, vector<32x128xf32> -> vector<32x128xf32>
    %c0_3 = arith.constant 0 : index
    %c0_4 = arith.constant 0 : index
    %4 = vector.load %arg3[%c0_3, %c0_4] : memref<1x128xf32, #tpu.memory_space<vmem>>, vector<1x128xf32>
    %5 = vector.broadcast %4 : vector<1x128xf32> to vector<32x128xf32>
    %6 = arith.addf %3, %5 : vector<32x128xf32>
    %cst_5 = arith.constant 5.000000e-01 : f32
    %7 = vector.broadcast %cst_5 : f32 to vector<32x128xf32>
    %8 = arith.mulf %7, %6 : vector<32x128xf32>
    %cst_6 = arith.constant 0.707106769 : f32
    %9 = vector.broadcast %cst_6 : f32 to vector<32x128xf32>
    %10 = arith.mulf %6, %9 : vector<32x128xf32>
    %11 = math.erf %10 : vector<32x128xf32>
    %cst_7 = arith.constant 1.000000e+00 : f32
    %12 = vector.broadcast %cst_7 : f32 to vector<32x128xf32>
    %13 = arith.addf %12, %11 : vector<32x128xf32>
    %14 = arith.mulf %8, %13 : vector<32x128xf32>
    %15 = arith.truncf %14 : vector<32x128xf32> to vector<32x128xbf16>
    %c0_8 = arith.constant 0 : index
    %c0_9 = arith.constant 0 : index
    %16 = vector.load %arg4[%c0_8, %c0_9] : memref<128x128xbf16, #tpu.memory_space<vmem>>, vector<128x128xbf16>
    %cst_10 = arith.constant dense<0.000000e+00> : vector<32x128xf32>
    %17 = tpu.matmul %15, %16, %cst_10 {dimension_numbers = #tpu.dot_dimension_numbers<[1], [0], [0], [1], [0, 0, 1, 1], [], []>} : vector<32x128xbf16>, vector<128x128xbf16>, vector<32x128xf32> -> vector<32x128xf32>
    %c0_11 = arith.constant 0 : index
    %c0_12 = arith.constant 0 : index
    %18 = vector.load %arg5[%c0_11, %c0_12] : memref<1x128xf32, #tpu.memory_space<vmem>>, vector<1x128xf32>
    %19 = vector.broadcast %18 : vector<1x128xf32> to vector<32x128xf32>
    %20 = arith.addf %17, %19 : vector<32x128xf32>
    %21 = vector.extract_strided_slice %20 {offsets = [0, 0], sizes = [32, 4], strides = [1, 1]} : vector<32x128xf32> to vector<32x4xf32>
    %22 = arith.negf %21 : vector<32x4xf32>
    %23 = math.exp %22 : vector<32x4xf32>
    %cst_13 = arith.constant 1.000000e+00 : f32
    %24 = vector.broadcast %cst_13 : f32 to vector<32x4xf32>
    %25 = arith.addf %24, %23 : vector<32x4xf32>
    %26 = arith.divf %24, %25 : vector<32x4xf32>
    %c0_14 = arith.constant 0 : index
    %c0_15 = arith.constant 0 : index
    %27 = vector.load %arg6[%c0_14, %c0_15] : memref<32x4xf32, #tpu.memory_space<vmem>>, vector<32x4xf32>
    tpu.vector_store %arg6[%c0_14, %c0_15], %26 {strides = array<i32>} : memref<32x4xf32, #tpu.memory_space<vmem>>, vector<32x4xf32>,
    return
  }
  func.func @transform_0(%arg0: i32) -> (i32, i32) {
    %c0_i32 = arith.constant 0 : i32
    %c0_i32_0 = arith.constant 0 : i32
    return %arg0, %c0_i32 : i32, i32
  }
  func.func @transform_1(%arg0: i32) -> (i32, i32) {
    %c0_i32 = arith.constant 0 : i32
    %c0_i32_0 = arith.constant 0 : i32
    %c0_i32_1 = arith.constant 0 : i32
    return %c0_i32, %c0_i32_0 : i32, i32
  }
  func.func @transform_2(%arg0: i32) -> (i32, i32) {
    %c0_i32 = arith.constant 0 : i32
    %c0_i32_0 = arith.constant 0 : i32
    %c0_i32_1 = arith.constant 0 : i32
    return %c0_i32, %c0_i32_0 : i32, i32
  }
  func.func @transform_3(%arg0: i32) -> (i32, i32) {
    %c0_i32 = arith.constant 0 : i32
    %c0_i32_0 = arith.constant 0 : i32
    %c0_i32_1 = arith.constant 0 : i32
    return %c0_i32, %c0_i32_0 : i32, i32
  }
  func.func @transform_4(%arg0: i32) -> (i32, i32) {
    %c0_i32 = arith.constant 0 : i32
    %c0_i32_0 = arith.constant 0 : i32
    %c0_i32_1 = arith.constant 0 : i32
    return %c0_i32, %c0_i32_0 : i32, i32
  }
  func.func @transform_5(%arg0: i32) -> (i32, i32) {
    %c0_i32 = arith.constant 0 : i32
    %c0_i32_0 = arith.constant 0 : i32
    return %arg0, %c0_i32 : i32, i32
  }
}

</mosaic_0001>

<llo_original>
// kernel: multitask_regression_forward.1
$region0: #{multitask_regression_forward.1}
  #allocation0 [shape = 'u32[]', space=smem, size = 0x4, offset = 0x4, fixed_abs, tag = 'smem constant byte address 0x4 - core index']
  #allocation1 [shape = 'u32[72,128]{1,0:T(1,128)}', space=vmem, size = 0x9000, scoped, tag = 'internal scratch']
  %s0 = inlined_call_operand.vmem [shape: f32[64,32], index: 0, kind: input, shape index: {}]
  %s1 = inlined_call_operand.vmem [shape: bf16[32,128], index: 1, kind: input, shape index: {}]
  %s2 = inlined_call_operand.vmem [shape: f32[1,128], index: 2, kind: input, shape index: {}]
  %s3 = inlined_call_operand.vmem [shape: bf16[128,128], index: 3, kind: input, shape index: {}]
  %s4 = inlined_call_operand.vmem [shape: f32[1,128], index: 4, kind: input, shape index: {}]
  %s5 = inlined_call_operand.vmem [shape: f32[64,4], index: 5, kind: output, shape index: {}]
  %s6 = sld [smem:[#allocation0]]
  $region53: #{multitask_regression_forward.1} parent=0
    _
  %s8 = ssub.s32 1, %s6
  %s9 = scalar_select 0, %s8, %s6
  loop: start=0, step=1, limit=4
  $region2: #{multitask_regression_forward.1} parent=0 // loop_pre_header
    _
  $region3: #{multitask_regression_forward.1} parent=0 // loop_header
    %s11 = sphi 0, %s15
    %p12 = scmp.ge.s32.totalorder %s11, 4
    %s21 = sphi 0, %s23
    %s24 = sphi 0, %s21
    %s25 = sphi 0, %s24
    %s41 = sphi 0, %s25
    %s45 = sphi 0, %s45
    %s47 = sphi 0, %s45
    %s48 = sphi 0, %s47
    %s62 = sphi 0, %s48
    %s66 = sphi 0, %s66
    %s68 = sphi 0, %s66
    %s69 = sphi 0, %s68
    %s83 = sphi 0, %s69
    %s87 = sphi 0, %s87
    %s89 = sphi 0, %s87
    %s90 = sphi 0, %s89
    %s104 = sphi 0, %s90
    %s108 = sphi 0, %s108
    %s110 = sphi 0, %s108
    %s111 = sphi 0, %s110
    %s125 = sphi 0, %s111
    %s131 = sphi 0, %s133
    %s134 = sphi 0, %s131
    %s135 = sphi 0, %s134
    %s151 = sphi 0, %s135
  $region4: #{multitask_regression_forward.1} parent=0 // loop_header_branch
    %14 = sbr.rel (%p12) target = $region8
  $region5: #{multitask_regression_forward.1} parent=0 // loop_body
    %s16 = ssub.s32 %s11, 1
    %s17 = ssub.s32 %s11, 2
    %s18 = sadd.s32 %s11, 1
    %s19 = ssub.s32 %s11, %s18
    %p20 = scmp.eq.s32.totalorder %s19, 0
    %s22 = sadd.s32 %s21, 1
    %s23 = scalar_select %p20, %s21, %s22
    %p26 = pneg %p20
    %p27 = scmp.eq.s32.totalorder %s11, 1
    %p28 = por %p26, %p27
    %p29 = scmp.ne.s32.totalorder %s21, %s24
    %p30 = scmp.eq.s32.totalorder %s11, 0
    %p31 = por %p29, %p30
    %p32 = scmp.ne.s32.totalorder %s21, %s24
    %p33 = scmp.eq.s32.totalorder %s16, 1
    %p34 = por %p32, %p33
    %p35 = scmp.ne.s32.totalorder %s24, %s25
    %p36 = scmp.eq.s32.totalorder %s16, 0
    %p37 = por %p35, %p36
    %p38 = scmp.ne.s32.totalorder %s24, %s25
    %p39 = scmp.eq.s32.totalorder %s17, 1
    %p40 = por %p38, %p39
    %p42 = scmp.ne.s32.totalorder %s25, %s41
    %p43 = scmp.eq.s32.totalorder %s17, 0
    %p44 = por %p42, %p43
    %s46 = sadd.s32 %s45, 1
    %p49 = scmp.eq.s32.totalorder %s11, 1
    %p50 = scmp.ne.s32.totalorder %s45, %s47
    %p51 = scmp.eq.s32.totalorder %s11, 0
    %p52 = por %p50, %p51
    %p53 = scmp.ne.s32.totalorder %s45, %s47
    %p54 = scmp.eq.s32.totalorder %s16, 1
    %p55 = por %p53, %p54
    %p56 = scmp.ne.s32.totalorder %s47, %s48
    %p57 = scmp.eq.s32.totalorder %s16, 0
    %p58 = por %p56, %p57
    %p59 = scmp.ne.s32.totalorder %s47, %s48
    %p60 = scmp.eq.s32.totalorder %s17, 1
    %p61 = por %p59, %p60
    %p63 = scmp.ne.s32.totalorder %s48, %s62
    %p64 = scmp.eq.s32.totalorder %s17, 0
    %p65 = por %p63, %p64
    %s67 = sadd.s32 %s66, 1
    %p70 = scmp.eq.s32.totalorder %s11, 1
    %p71 = scmp.ne.s32.totalorder %s66, %s68
    %p72 = scmp.eq.s32.totalorder %s11, 0
    %p73 = por %p71, %p72
    %p74 = scmp.ne.s32.totalorder %s66, %s68
    %p75 = scmp.eq.s32.totalorder %s16, 1
    %p76 = por %p74, %p75
    %p77 = scmp.ne.s32.totalorder %s68, %s69
    %p78 = scmp.eq.s32.totalorder %s16, 0
    %p79 = por %p77, %p78
    %p80 = scmp.ne.s32.totalorder %s68, %s69
    %p81 = scmp.eq.s32.totalorder %s17, 1
    %p82 = por %p80, %p81
    %p84 = scmp.ne.s32.totalorder %s69, %s83
    %p85 = scmp.eq.s32.totalorder %s17, 0
    %p86 = por %p84, %p85
    %s88 = sadd.s32 %s87, 1
    %p91 = scmp.eq.s32.totalorder %s11, 1
    %p92 = scmp.ne.s32.totalorder %s87, %s89
    %p93 = scmp.eq.s32.totalorder %s11, 0
    %p94 = por %p92, %p93
    %p95 = scmp.ne.s32.totalorder %s87, %s89
    %p96 = scmp.eq.s32.totalorder %s16, 1
    %p97 = por %p95, %p96
    %p98 = scmp.ne.s32.totalorder %s89, %s90
    %p99 = scmp.eq.s32.totalorder %s16, 0
    %p100 = por %p98, %p99
    %p101 = scmp.ne.s32.totalorder %s89, %s90
    %p102 = scmp.eq.s32.totalorder %s17, 1
    %p103 = por %p101, %p102
    %p105 = scmp.ne.s32.totalorder %s90, %s104
    %p106 = scmp.eq.s32.totalorder %s17, 0
    %p107 = por %p105, %p106
    %s109 = sadd.s32 %s108, 1
    %p112 = scmp.eq.s32.totalorder %s11, 1
    %p113 = scmp.ne.s32.totalorder %s108, %s110
    %p114 = scmp.eq.s32.totalorder %s11, 0
    %p115 = por %p113, %p114
    %p116 = scmp.ne.s32.totalorder %s108, %s110
    %p117 = scmp.eq.s32.totalorder %s16, 1
    %p118 = por %p116, %p117
    %p119 = scmp.ne.s32.totalorder %s110, %s111
    %p120 = scmp.eq.s32.totalorder %s16, 0
    %p121 = por %p119, %p120
    %p122 = scmp.ne.s32.totalorder %s110, %s111
    %p123 = scmp.eq.s32.totalorder %s17, 1
    %p124 = por %p122, %p123
    %p126 = scmp.ne.s32.totalorder %s111, %s125
    %p127 = scmp.eq.s32.totalorder %s17, 0
    %p128 = por %p126, %p127
    %s129 = ssub.s32 %s11, %s18
    %p130 = scmp.eq.s32.totalorder %s129, 0
    %s132 = sadd.s32 %s131, 1
    %s133 = scalar_select %p130, %s131, %s132
    %p136 = pneg %p130
    %p137 = scmp.eq.s32.totalorder %s11, 1
    %p138 = por %p136, %p137
    %p139 = scmp.ne.s32.totalorder %s131, %s134
    %p140 = scmp.eq.s32.totalorder %s11, 0
    %p141 = por %p139, %p140
    %p142 = scmp.ne.s32.totalorder %s131, %s134
    %p143 = scmp.eq.s32.totalorder %s16, 1
    %p144 = por %p142, %p143
    %p145 = scmp.ne.s32.totalorder %s134, %s135
    %p146 = scmp.eq.s32.totalorder %s16, 0
    %p147 = por %p145, %p146
    %p148 = scmp.ne.s32.totalorder %s134, %s135
    %p149 = scmp.eq.s32.totalorder %s17, 1
    %p150 = por %p148, %p149
    %p152 = scmp.ne.s32.totalorder %s135, %s151
    %p153 = scmp.eq.s32.totalorder %s17, 0
    %p154 = por %p152, %p153
    %p155 = scmp.le.s32.totalorder 1, %s11
    %p156 = scmp.lt.s32.totalorder %s11, 3
    %p157 = pnand %p155, %p156
    %p158 = pneg %p157
    // Predicated region
    $region9: #{multitask_regression_forward.1} parent=5 // pred_check
      _
    $region10: #{multitask_regression_forward.1} parent=5 // pred_check_branch
      %160 = sbr.rel (%p157) target = $region12
    $region11: #{multitask_regression_forward.1} parent=5 // pred_region
      %s161 = ssub.s32 %s11, 1
      // Predicated region
      $region13: #{multitask_regression_forward.1} parent=11 // pred_check
        %p162 = pneg %p58
      $region14: #{multitask_regression_forward.1} parent=11 // pred_check_branch
        %164 = sbr.rel (%p162) target = $region16
      $region15: #{multitask_regression_forward.1} parent=11 // pred_region
        _
      $region16: #{multitask_regression_forward.1} parent=11 // pred_fallthru
        _
      // Predicated region
      $region17: #{multitask_regression_forward.1} parent=11 // pred_check
        %p165 = pneg %p79
      $region18: #{multitask_regression_forward.1} parent=11 // pred_check_branch
        %167 = sbr.rel (%p165) target = $region20
      $region19: #{multitask_regression_forward.1} parent=11 // pred_region
        _
      $region20: #{multitask_regression_forward.1} parent=11 // pred_fallthru
        _
      // Predicated region
      $region21: #{multitask_regression_forward.1} parent=11 // pred_check
        %p168 = pneg %p100
      $region22: #{multitask_regression_forward.1} parent=11 // pred_check_branch
        %170 = sbr.rel (%p168) target = $region24
      $region23: #{multitask_regression_forward.1} parent=11 // pred_region
        _
      $region24: #{multitask_regression_forward.1} parent=11 // pred_fallthru
        _
      // Predicated region
      $region25: #{multitask_regression_forward.1} parent=11 // pred_check
        %p171 = pneg %p121
      $region26: #{multitask_regression_forward.1} parent=11 // pred_check_branch
        %173 = sbr.rel (%p171) target = $region28
      $region27: #{multitask_regression_forward.1} parent=11 // pred_region
        _
      $region28: #{multitask_regression_forward.1} parent=11 // pred_fallthru
        _
    $region12: #{multitask_regression_forward.1} parent=5 // pred_fallthru
      _
    %p174 = scmp.lt.s32.totalorder %s11, 2
    // Predicated region
    $region29: #{multitask_regression_forward.1} parent=5 // pred_check
      %p175 = pneg %p174
    $region30: #{multitask_regression_forward.1} parent=5 // pred_check_branch
      %177 = sbr.rel (%p175) target = $region32
    $region31: #{multitask_regression_forward.1} parent=5 // pred_region
      // Predicated region
      $region33: #{multitask_regression_forward.1} parent=31 // pred_check
        %p178 = pneg %p31
      $region34: #{multitask_regression_forward.1} parent=31 // pred_check_branch
        %180 = sbr.rel (%p178) target = $region36
      $region35: #{multitask_regression_forward.1} parent=31 // pred_region
        %s181 = smul.u32 4, %s11
        %p182 = scmp.lt.s32.totalorder %s181, 7
        %s183 = scalar_select %p182, %s181, 7
        %s184 = smul.addr %s183, 8
        %s185 = scalar_lea.vmem %s0, %s184
        %s186 = smul.u32 4, %s11
      $region36: #{multitask_regression_forward.1} parent=31 // pred_fallthru
        _
    $region32: #{multitask_regression_forward.1} parent=5 // pred_fallthru
      _
    %p187 = scmp.le.s32.totalorder 1, %s11
    %p188 = scmp.lt.s32.totalorder %s11, 3
    %p189 = pnand %p187, %p188
    %p190 = pneg %p189
    // Predicated region
    $region37: #{multitask_regression_forward.1} parent=5 // pred_check
      _
    $region38: #{multitask_regression_forward.1} parent=5 // pred_check_branch
      %192 = sbr.rel (%p189) target = $region40
    $region39: #{multitask_regression_forward.1} parent=5 // pred_region
      %s193 = ssub.s32 %s11, 1
      %s194 = smul.u32 4, %s16
      %p195 = scmp.lt.s32.totalorder %s194, 7
      %s196 = scalar_select %p195, %s194, 7
      %s197 = smul.addr %s196, 8
      %s198 = scalar_lea.vmem %s0, %s197
      %p199 = pneg %p37
      %p200 = pneg %p34
      %p201 = pneg %p58
      %p202 = pneg %p55
      %p203 = pneg %p79
      %p204 = pneg %p76
      %p205 = pneg %p100
      %p206 = pneg %p97
      %p207 = pneg %p121
      %p208 = pneg %p118
      %p209 = pneg %p147
      %p210 = pneg %p144
      %s211 = smul.u32 4, %s16
      %p212 = scmp.lt.s32.totalorder %s211, 7
      %s213 = scalar_select %p212, %s211, 7
      %s214 = smul.addr %s213, 8
      %s215 = scalar_lea.vmem %s5, %s214
      %s216 = smul.u32 4, %s16
      %p217 = scmp.lt.s32.totalorder %s216, 7
      %s218 = scalar_select %p217, %s216, 7
      %s219 = smul.addr %s218, 8
      %s220 = scalar_lea.vmem %s0, %s219
      %s221 = smul.u32 4, %s16
      %s222 = smul.u32 4, %s16
      %p223 = scmp.lt.s32.totalorder %s222, 7
      %s224 = scalar_select %p223, %s222, 7
      %s225 = smul.addr %s224, 8
      %s226 = scalar_lea.vmem %s5, %s225
      %s227 = smul.u32 4, %s16
      %v229 = vld [vmem:[%s220] sm:$0xff]
      %v230 = vld [vmem:[%s220 + $0x8] sm:$0xff]
      %v231 = vld [vmem:[%s220 + $0x10] sm:$0xff]
      %v232 = vld [vmem:[%s220 + $0x18] sm:$0xff]
      %v233 = vpack.c.bf16 %v230, %v229
      %v234 = vpack.c.bf16 %v232, %v231
      %v235 = vld [vmem:[%s1] sm:$0xf]
      %v236 = vld [vmem:[%s1 + $0x4] sm:$0xf]
      %v237 = vld [vmem:[%s1 + $0x8] sm:$0xf]
      %v238 = vld [vmem:[%s1 + $0xc] sm:$0xf]
      %v239 = vld [vmem:[%s2] sm:$0x1]
      %v241 = vperm.slane %v239, 0
      %v247 = vunpack.c.l.b16 %v235
      %v248 = vunpack.c.l.b16 %v236
      %v249 = vunpack.c.l.b16 %v237
      %v250 = vunpack.c.l.b16 %v238
      %v251 = vpack.c.b16 %v248, %v247
      %v252 = vpack.c.b16 %v250, %v249
      %vm255 = vcmask 261120
      %v257 = vsel %vm255, %v233, 0
      %v260 = vsel %vm255, %v234, 0
      %262 = vmatpush.bf16.msra.mxu0 0
      %263 = vmatpush.bf16.msra.mxu0 0
      %264 = vmatpush.bf16.msra.mxu0 0
      %265 = vmatpush.bf16.msra.mxu0 0
      %266 = vmatpush.bf16.msra.mxu0 0
      %267 = vmatpush.bf16.msra.mxu0 0
      %268 = vmatpush.bf16.msra.mxu0 %v252
      %269 = vmatpush.bf16.msra.mxu0 %v251
      %270 = vmatmul.bf16.gmra.mxu0 %v257
      %v271 = vpop.f32.mrf.mxu0
      %v272 = vadd.f32 %v241, %v271
      %v273 = vpop.f32.mrf.mxu0
      %v274 = vadd.f32 %v241, %v273
      %275 = vmatmul.bf16.gmra.mxu0 %v260
      %v276 = vpop.f32.mrf.mxu0
      %v277 = vadd.f32 %v241, %v276
      %v278 = vpop.f32.mrf.mxu0
      %v279 = vadd.f32 %v241, %v278
      %280 = vdwg.mxu0
      %v281 = vmul.f32 %v272, 0.5
      %v282 = vmul.f32 %v274, 0.5
      %v283 = vmul.f32 %v277, 0.5
      %v284 = vmul.f32 %v279, 0.5
      %v285 = vmul.f32 %v272, 0.70710677
      %v286 = vmul.f32 %v274, 0.70710677
      %v287 = vmul.f32 %v277, 0.70710677
      %v288 = vmul.f32 %v279, 0.70710677
      %v289 = vmul.f32 %v285, %v285
      %v290 = vmin.f32 16.0, %v289
      %v291 = vmul.f32 %v290, 2.1237322e-06
      %v292 = vadd.f32 %v291, 0.00028619796
      %v293 = vmul.f32 %v290, %v292
      %v294 = vadd.f32 %v293, 0.0036580483
      %v295 = vmul.f32 %v290, %v294
      %v296 = vadd.f32 %v295, 0.05243302
      %v297 = vmul.f32 %v290, %v296
      %v298 = vadd.f32 %v297, 0.18741608
      %v299 = vmul.f32 %v290, %v298
      %v300 = vadd.f32 %v299, 1.1283791
      %v301 = vmul.f32 %v285, %v300
      %v302 = vmul.f32 %v290, 3.8918573e-05
      %v303 = vadd.f32 %v302, 0.001143296
      %v304 = vmul.f32 %v290, %v303
      %v305 = vadd.f32 %v304, 0.014752088
      %v306 = vmul.f32 %v290, %v305
      %v307 = vadd.f32 %v306, 0.112945676
      %v308 = vmul.f32 %v290, %v307
      %v309 = vadd.f32 %v308, 0.4994258
      %v310 = vmul.f32 %v290, %v309
      %v311 = vadd.f32 %v310, 1.0
      %v312 = vrcp.pop %v311
      %v313 = vmul.f32 %v311, %v312
      %v314 = vsub.f32 1.0, %v313
      %v315 = vmul.f32 %v312, %v314
      %v316 = vadd.f32 %v312, %v315
      %vm317 = vweird.f32 %v311
      %vm318 = vweird.f32 %v312
      %vm319 = vmor %vm317, %vm318
      %v320 = vsel %vm319, %v312, %v316
      %v321 = vand.u32 2147483647, %v311
      %vm322 = vcmp.eq.f32.partialorder %v321, 8.507059e+37
      %v323 = vand.u32 %v311, 2147483648
      %v324 = vor.u32 1.1754944e-38, %v323
      %v325 = vsel %vm322, %v324, %v320
      %v326 = vmul.f32 %v301, %v325
      %v327 = vmin.f32 %v326, 1.0
      %v328 = vmax.f32 %v327, -1.0
      %v329 = vmul.f32 %v286, %v286
      %v330 = vmin.f32 16.0, %v329
      %v331 = vmul.f32 %v330, 2.1237322e-06
      %v332 = vadd.f32 %v331, 0.00028619796
      %v333 = vmul.f32 %v330, %v332
      %v334 = vadd.f32 %v333, 0.0036580483
      %v335 = vmul.f32 %v330, %v334
      %v336 = vadd.f32 %v335, 0.05243302
      %v337 = vmul.f32 %v330, %v336
      %v338 = vadd.f32 %v337, 0.18741608
      %v339 = vmul.f32 %v330, %v338
      %v340 = vadd.f32 %v339, 1.1283791
      %v341 = vmul.f32 %v286, %v340
      %v342 = vmul.f32 %v330, 3.8918573e-05
      %v343 = vadd.f32 %v342, 0.001143296
      %v344 = vmul.f32 %v330, %v343
      %v345 = vadd.f32 %v344, 0.014752088
      %v346 = vmul.f32 %v330, %v345
      %v347 = vadd.f32 %v346, 0.112945676
      %v348 = vmul.f32 %v330, %v347
      %v349 = vadd.f32 %v348, 0.4994258
      %v350 = vmul.f32 %v330, %v349
      %v351 = vadd.f32 %v350, 1.0
      %v352 = vrcp.pop %v351
      %v353 = vmul.f32 %v351, %v352
      %v354 = vsub.f32 1.0, %v353
      %v355 = vmul.f32 %v352, %v354
      %v356 = vadd.f32 %v352, %v355
      %vm357 = vweird.f32 %v351
      %vm358 = vweird.f32 %v352
      %vm359 = vmor %vm357, %vm358
      %v360 = vsel %vm359, %v352, %v356
      %v361 = vand.u32 2147483647, %v351
      %vm362 = vcmp.eq.f32.partialorder %v361, 8.507059e+37
      %v363 = vand.u32 %v351, 2147483648
      %v364 = vor.u32 1.1754944e-38, %v363
      %v365 = vsel %vm362, %v364, %v360
      %v366 = vmul.f32 %v341, %v365
      %v367 = vmin.f32 %v366, 1.0
      %v368 = vmax.f32 %v367, -1.0
      %v369 = vmul.f32 %v287, %v287
      %v370 = vmin.f32 16.0, %v369
      %v371 = vmul.f32 %v370, 2.1237322e-06
      %v372 = vadd.f32 %v371, 0.00028619796
      %v373 = vmul.f32 %v370, %v372
      %v374 = vadd.f32 %v373, 0.0036580483
      %v375 = vmul.f32 %v370, %v374
      %v376 = vadd.f32 %v375, 0.05243302
      %v377 = vmul.f32 %v370, %v376
      %v378 = vadd.f32 %v377, 0.18741608
      %v379 = vmul.f32 %v370, %v378
      %v380 = vadd.f32 %v379, 1.1283791
      %v381 = vmul.f32 %v287, %v380
      %v382 = vmul.f32 %v370, 3.8918573e-05
      %v383 = vadd.f32 %v382, 0.001143296
      %v384 = vmul.f32 %v370, %v383
      %v385 = vadd.f32 %v384, 0.014752088
      %v386 = vmul.f32 %v370, %v385
      %v387 = vadd.f32 %v386, 0.112945676
      %v388 = vmul.f32 %v370, %v387
      %v389 = vadd.f32 %v388, 0.4994258
      %v390 = vmul.f32 %v370, %v389
      %v391 = vadd.f32 %v390, 1.0
      %v392 = vrcp.pop %v391
      %v393 = vmul.f32 %v391, %v392
      %v394 = vsub.f32 1.0, %v393
      %v395 = vmul.f32 %v392, %v394
      %v396 = vadd.f32 %v392, %v395
      %vm397 = vweird.f32 %v391
      %vm398 = vweird.f32 %v392
      %vm399 = vmor %vm397, %vm398
      %v400 = vsel %vm399, %v392, %v396
      %v401 = vand.u32 2147483647, %v391
      %vm402 = vcmp.eq.f32.partialorder %v401, 8.507059e+37
      %v403 = vand.u32 %v391, 2147483648
      %v404 = vor.u32 1.1754944e-38, %v403
      %v405 = vsel %vm402, %v404, %v400
      %v406 = vmul.f32 %v381, %v405
      %v407 = vmin.f32 %v406, 1.0
      %v408 = vmax.f32 %v407, -1.0
      %v409 = vmul.f32 %v288, %v288
      %v410 = vmin.f32 16.0, %v409
      %v411 = vmul.f32 %v410, 2.1237322e-06
      %v412 = vadd.f32 %v411, 0.00028619796
      %v413 = vmul.f32 %v410, %v412
      %v414 = vadd.f32 %v413, 0.0036580483
      %v415 = vmul.f32 %v410, %v414
      %v416 = vadd.f32 %v415, 0.05243302
      %v417 = vmul.f32 %v410, %v416
      %v418 = vadd.f32 %v417, 0.18741608
      %v419 = vmul.f32 %v410, %v418
      %v420 = vadd.f32 %v419, 1.1283791
      %v421 = vmul.f32 %v288, %v420
      %v422 = vmul.f32 %v410, 3.8918573e-05
      %v423 = vadd.f32 %v422, 0.001143296
      %v424 = vmul.f32 %v410, %v423
      %v425 = vadd.f32 %v424, 0.014752088
      %v426 = vmul.f32 %v410, %v425
      %v427 = vadd.f32 %v426, 0.112945676
      %v428 = vmul.f32 %v410, %v427
      %v429 = vadd.f32 %v428, 0.4994258
      %v430 = vmul.f32 %v410, %v429
      %v431 = vadd.f32 %v430, 1.0
      %v432 = vrcp.pop %v431
      %v433 = vmul.f32 %v431, %v432
      %v434 = vsub.f32 1.0, %v433
      %v435 = vmul.f32 %v432, %v434
      %v436 = vadd.f32 %v432, %v435
      %vm437 = vweird.f32 %v431
      %vm438 = vweird.f32 %v432
      %vm439 = vmor %vm437, %vm438
      %v440 = vsel %vm439, %v432, %v436
      %v441 = vand.u32 2147483647, %v431
      %vm442 = vcmp.eq.f32.partialorder %v441, 8.507059e+37
      %v443 = vand.u32 %v431, 2147483648
      %v444 = vor.u32 1.1754944e-38, %v443
      %v445 = vsel %vm442, %v444, %v440
      %v446 = vmul.f32 %v421, %v445
      %v447 = vmin.f32 %v446, 1.0
      %v448 = vmax.f32 %v447, -1.0
      %v449 = vadd.f32 %v328, 1.0
      %v450 = vadd.f32 %v368, 1.0
      %v451 = vadd.f32 %v408, 1.0
      %v452 = vadd.f32 %v448, 1.0
      %v453 = vmul.f32 %v281, %v449
      %v454 = vmul.f32 %v282, %v450
      %v455 = vmul.f32 %v283, %v451
      %v456 = vmul.f32 %v284, %v452
      %v457 = vpack.c.bf16 %v454, %v453
      %v458 = vpack.c.bf16 %v456, %v455
      %v459 = vld [vmem:[%s3] sm:$0xf]
      %v460 = vld [vmem:[%s3 + $0x4] sm:$0xf]
      %v461 = vld [vmem:[%s3 + $0x8] sm:$0xf]
      %v462 = vld [vmem:[%s3 + $0xc] sm:$0xf]
      %v463 = vld [vmem:[%s3 + $0x10] sm:$0xf]
      %v464 = vld [vmem:[%s3 + $0x14] sm:$0xf]
      %v465 = vld [vmem:[%s3 + $0x18] sm:$0xf]
      %v466 = vld [vmem:[%s3 + $0x1c] sm:$0xf]
      %v467 = vld [vmem:[%s3 + $0x20] sm:$0xf]
      %v468 = vld [vmem:[%s3 + $0x24] sm:$0xf]
      %v469 = vld [vmem:[%s3 + $0x28] sm:$0xf]
      %v470 = vld [vmem:[%s3 + $0x2c] sm:$0xf]
      %v471 = vld [vmem:[%s3 + $0x30] sm:$0xf]
      %v472 = vld [vmem:[%s3 + $0x34] sm:$0xf]
      %v473 = vld [vmem:[%s3 + $0x38] sm:$0xf]
      %v474 = vld [vmem:[%s3 + $0x3c] sm:$0xf]
      %v475 = vld [vmem:[%s4] sm:$0x1]
      %v477 = vperm.slane %v475, 0
      %v495 = vunpack.c.l.b16 %v459
      %v496 = vunpack.c.l.b16 %v460
      %v497 = vunpack.c.l.b16 %v461
      %v498 = vunpack.c.l.b16 %v462
      %v499 = vunpack.c.l.b16 %v463
      %v500 = vunpack.c.l.b16 %v464
      %v501 = vunpack.c.l.b16 %v465
      %v502 = vunpack.c.l.b16 %v466
      %v503 = vunpack.c.l.b16 %v467
      %v504 = vunpack.c.l.b16 %v468
      %v505 = vunpack.c.l.b16 %v469
      %v506 = vunpack.c.l.b16 %v470
      %v507 = vunpack.c.l.b16 %v471
      %v508 = vunpack.c.l.b16 %v472
      %v509 = vunpack.c.l.b16 %v473
      %v510 = vunpack.c.l.b16 %v474
      %v511 = vpack.c.b16 %v496, %v495
      %v512 = vpack.c.b16 %v498, %v497
      %v513 = vpack.c.b16 %v500, %v499
      %v514 = vpack.c.b16 %v502, %v501
      %v515 = vpack.c.b16 %v504, %v503
      %v516 = vpack.c.b16 %v506, %v505
      %v517 = vpack.c.b16 %v508, %v507
      %v518 = vpack.c.b16 %v510, %v509
      %527 = vmatpush.bf16.msra.mxu0 %v518
      %528 = vmatpush.bf16.msra.mxu0 %v517
      %529 = vmatpush.bf16.msra.mxu0 %v516
      %530 = vmatpush.bf16.msra.mxu0 %v515
      %531 = vmatpush.bf16.msra.mxu0 %v514
      %532 = vmatpush.bf16.msra.mxu0 %v513
      %533 = vmatpush.bf16.msra.mxu0 %v512
      %534 = vmatpush.bf16.msra.mxu0 %v511
      %535 = vmatmul.bf16.gmra.mxu0 %v457
      %v536 = vpop.f32.mrf.mxu0
      %v537 = vadd.f32 %v477, %v536
      %v538 = vpop.f32.mrf.mxu0
      %v539 = vadd.f32 %v477, %v538
      %540 = vmatmul.bf16.gmra.mxu0 %v458
      %v541 = vpop.f32.mrf.mxu0
      %v542 = vadd.f32 %v477, %v541
      %v543 = vpop.f32.mrf.mxu0
      %v544 = vadd.f32 %v477, %v543
      %545 = vdwg.mxu0
      %v546 = vxor.u32 %v537, 2147483648
      %v547 = vxor.u32 %v539, 2147483648
      %v548 = vxor.u32 %v542, 2147483648
      %v549 = vxor.u32 %v544, 2147483648
      %v550 = vmul.f32 %v546, 1.442695
      %v551 = vpow.pop %v550
      %v552 = vmul.f32 %v547, 1.442695
      %v553 = vpow.pop %v552
      %v554 = vmul.f32 %v548, 1.442695
      %v555 = vpow.pop %v554
      %v556 = vmul.f32 %v549, 1.442695
      %v557 = vpow.pop %v556
      %v558 = vadd.f32 %v551, 1.0
      %v559 = vadd.f32 %v553, 1.0
      %v560 = vadd.f32 %v555, 1.0
      %v561 = vadd.f32 %v557, 1.0
      %v562 = vrcp.pop %v558
      %v563 = vmul.f32 %v558, %v562
      %v564 = vsub.f32 1.0, %v563
      %v565 = vmul.f32 %v562, %v564
      %v566 = vadd.f32 %v562, %v565
      %vm567 = vweird.f32 %v558
      %vm568 = vweird.f32 %v562
      %vm569 = vmor %vm567, %vm568
      %v570 = vsel %vm569, %v562, %v566
      %v571 = vand.u32 2147483647, %v558
      %vm572 = vcmp.eq.f32.partialorder %v571, 8.507059e+37
      %v573 = vand.u32 %v558, 2147483648
      %v574 = vor.u32 1.1754944e-38, %v573
      %v575 = vsel %vm572, %v574, %v570
      %v576 = vmul.f32 1.0, %v575
      %v577 = vrcp.pop %v559
      %v578 = vmul.f32 %v559, %v577
      %v579 = vsub.f32 1.0, %v578
      %v580 = vmul.f32 %v577, %v579
      %v581 = vadd.f32 %v577, %v580
      %vm582 = vweird.f32 %v559
      %vm583 = vweird.f32 %v577
      %vm584 = vmor %vm582, %vm583
      %v585 = vsel %vm584, %v577, %v581
      %v586 = vand.u32 2147483647, %v559
      %vm587 = vcmp.eq.f32.partialorder %v586, 8.507059e+37
      %v588 = vand.u32 %v559, 2147483648
      %v589 = vor.u32 1.1754944e-38, %v588
      %v590 = vsel %vm587, %v589, %v585
      %v591 = vmul.f32 1.0, %v590
      %v592 = vrcp.pop %v560
      %v593 = vmul.f32 %v560, %v592
      %v594 = vsub.f32 1.0, %v593
      %v595 = vmul.f32 %v592, %v594
      %v596 = vadd.f32 %v592, %v595
      %vm597 = vweird.f32 %v560
      %vm598 = vweird.f32 %v592
      %vm599 = vmor %vm597, %vm598
      %v600 = vsel %vm599, %v592, %v596
      %v601 = vand.u32 2147483647, %v560
      %vm602 = vcmp.eq.f32.partialorder %v601, 8.507059e+37
      %v603 = vand.u32 %v560, 2147483648
      %v604 = vor.u32 1.1754944e-38, %v603
      %v605 = vsel %vm602, %v604, %v600
      %v606 = vmul.f32 1.0, %v605
      %v607 = vrcp.pop %v561
      %v608 = vmul.f32 %v561, %v607
      %v609 = vsub.f32 1.0, %v608
      %v610 = vmul.f32 %v607, %v609
      %v611 = vadd.f32 %v607, %v610
      %vm612 = vweird.f32 %v561
      %vm613 = vweird.f32 %v607
      %vm614 = vmor %vm612, %vm613
      %v615 = vsel %vm614, %v607, %v611
      %v616 = vand.u32 2147483647, %v561
      %vm617 = vcmp.eq.f32.partialorder %v616, 8.507059e+37
      %v618 = vand.u32 %v561, 2147483648
      %v619 = vor.u32 1.1754944e-38, %v618
      %v620 = vsel %vm617, %v619, %v615
      %v621 = vmul.f32 1.0, %v620
      %vm622 = vcmask 31744
      %623 = vst.msk [vmem:[%s226] sm:$0xff] %vm622, %v576
      %624 = vst.msk [vmem:[%s226 + $0x8] sm:$0xff] %vm622, %v591
      %625 = vst.msk [vmem:[%s226 + $0x10] sm:$0xff] %vm622, %v606
      %626 = vst.msk [vmem:[%s226 + $0x18] sm:$0xff] %vm622, %v621
      %s627 = smul.u32 4, %s16
      %p628 = scmp.lt.s32.totalorder %s627, 7
      %s629 = scalar_select %p628, %s627, 7
      %s630 = smul.addr %s629, 8
      %s631 = scalar_lea.vmem %s5, %s630
      // Predicated region
      $region41: #{multitask_regression_forward.1} parent=39 // pred_check
        %p632 = pneg %p144
      $region42: #{multitask_regression_forward.1} parent=39 // pred_check_branch
        %634 = sbr.rel (%p632) target = $region44
      $region43: #{multitask_regression_forward.1} parent=39 // pred_region
        %s635 = smul.u32 4, %s16
      $region44: #{multitask_regression_forward.1} parent=39 // pred_fallthru
        _
    $region40: #{multitask_regression_forward.1} parent=5 // pred_fallthru
      _
    %p636 = scmp.le.s32.totalorder 2, %s11
    // Predicated region
    $region45: #{multitask_regression_forward.1} parent=5 // pred_check
      %p637 = pneg %p636
    $region46: #{multitask_regression_forward.1} parent=5 // pred_check_branch
      %639 = sbr.rel (%p637) target = $region48
    $region47: #{multitask_regression_forward.1} parent=5 // pred_region
      %s640 = ssub.s32 %s11, 2
      // Predicated region
      $region49: #{multitask_regression_forward.1} parent=47 // pred_check
        %p641 = pneg %p150
      $region50: #{multitask_regression_forward.1} parent=47 // pred_check_branch
        %643 = sbr.rel (%p641) target = $region52
      $region51: #{multitask_regression_forward.1} parent=47 // pred_region
        %s644 = smul.u32 4, %s17
        %p645 = scmp.lt.s32.totalorder %s644, 7
        %s646 = scalar_select %p645, %s644, 7
        %s647 = smul.addr %s646, 8
        %s648 = scalar_lea.vmem %s5, %s647
      $region52: #{multitask_regression_forward.1} parent=47 // pred_fallthru
        _
    $region48: #{multitask_regression_forward.1} parent=5 // pred_fallthru
      _
  $region6: #{multitask_regression_forward.1} parent=0 // loop_footer
    %s15 = sadd.s32 1, %s11
  $region7: #{multitask_regression_forward.1} parent=0 // loop_footer_branch
    %10 = sbr.rel target = $region3
  $region8: #{multitask_regression_forward.1} parent=0 // loop_exit
    _

</llo_original>
